<compile_context>
chip_gen: v6e
topology: v6e:2x2x1
jax: 0.10.0
libtpu: 0.0.40
codegen_flags: <defaults>
</compile_context>

<pallas_src>
import jax
import jax.numpy as jnp
from jax.experimental import pallas as pl
from jax.experimental.pallas import tpu as pltpu


def _reverse_attention_kernel(w_ref, p_ref, params_ref, out_ref, gauss_ref):
    # w_ref:      (Op, Kd)  bf16 conv weight, rows = out channels, cols = (kh, kw, c)
    # p_ref:      (Kd, TM)  bf16 im2col patches tile (features x pixels) -- lanes = pixels
    # params_ref: (5,)      f32 SMEM [a, mu, gamma_l, gamma_r, alpha] (a/mu/gamma pre-clamped)
    # out_ref:    (Op, TM)  f32 relu(conv)^alpha      (MaskUpdate)
    # gauss_ref:  (Op, TM)  f32 gaussian activation   (GaussianActivation)
    conv = jnp.dot(w_ref[...], p_ref[...], preferred_element_type=jnp.float32)

    a = params_ref[0]
    mu = params_ref[1]
    gamma_l = params_ref[2]
    gamma_r = params_ref[3]
    alpha = params_ref[4]

    # GaussianActivation: one EUP exp per element, branch handled with VPU selects.
    # Left of mu:  a * exp(-gamma_l * (x-mu)^2)
    # Right of mu: 1 + (a-1) * exp(-gamma_r * (x-mu)^2)
    left = conv < mu
    gamma = jnp.where(left, gamma_l, gamma_r)
    e = jnp.exp(-gamma * (conv - mu) ** 2)
    scale = jnp.where(left, a, a - 1.0)
    offset = jnp.where(left, 0.0, 1.0)
    gauss_ref[...] = offset + scale * e

    # MaskUpdate: relu(conv) ** alpha  (pow via exp/log, guarded at 0).
    r = jnp.maximum(conv, 0.0)
    pos = r > 0.0
    safe = jnp.where(pos, r, 1.0)
    out_ref[...] = jnp.where(pos, jnp.exp(alpha * jnp.log(safe)), 0.0)


def _im2col_transposed(x, K, stride, pad):
    """x: (N, C, H, W) -> patches^T of shape (C*K*K, N*Ho*Wo), rows ordered (kh, kw, c)."""
    N, C, H, W = x.shape
    Ho = (H + 2 * pad - K) // stride + 1
    Wo = (W + 2 * pad - K) // stride + 1
    xp = jnp.pad(x, ((0, 0), (0, 0), (pad, pad), (pad, pad)))
    rows = []
    for kh in range(K):
        for kw in range(K):
            sl = xp[:, :, kh:kh + stride * Ho:stride, kw:kw + stride * Wo:stride]  # (N,C,Ho,Wo)
            rows.append(jnp.transpose(sl, (1, 0, 2, 3)).reshape(C, N * Ho * Wo))
    return jnp.concatenate(rows, axis=0), Ho, Wo  # (K*K*C, M)


def _round_up(x, m):
    return ((x + m - 1) // m) * m


def reverse_attention_layer(input_masks, weight, *, a=1.1, mu=2.0,
                            gamma_l=1.0, gamma_r=1.0, alpha=0.8,
                            kernel_size=4, stride=2, padding=1):
    """input_masks: (N, C, H, W) f32; weight: (O, C, K, K) f32 (no bias).
    Returns (output_masks, gaussian_masks), each (N, O, H//2, W//2) in NCHW like the module."""
    N, C, H, W = input_masks.shape
    O = weight.shape[0]
    K = kernel_size

    # bf16 MXU operands (f32 accumulate inside the kernel); cast up front so the im2col
    # intermediate is already half-width in HBM.
    x_bf16 = input_masks.astype(jnp.bfloat16)
    pT, Ho, Wo = _im2col_transposed(x_bf16, K, stride, padding)  # (Kd, M)
    Kd, M = pT.shape

    # Weight rows in (kh, kw, c) order to match the patch rows; pad O to a sublane multiple
    # (no-op for O=8).  Padded O rows have conv==0 -> nonzero gaussian, dropped in to_nchw.
    Op = _round_up(O, 8)
    w_mat = jnp.transpose(weight, (0, 2, 3, 1)).reshape(O, Kd).astype(jnp.bfloat16)
    if Op > O:
        w_mat = jnp.pad(w_mat, ((0, Op - O), (0, 0)))

    # Tile the pixel (lane) axis.  ~512 lanes/step is enough to reach the HBM roofline;
    # prefer >=2 grid steps so v7x's two TensorCores both get work and DMAs overlap compute.
    Mp_min = _round_up(M, 128)
    TM = min(512, Mp_min)
    if Mp_min >= 256 and Mp_min // TM < 2:
        TM = _round_up(Mp_min // 2, 128)
    Mp = _round_up(Mp_min, TM)
    grid_m = Mp // TM
    if Mp > M:  # only materialize a padded copy when M is not already tile-aligned
        pT = jnp.pad(pT, ((0, 0), (0, Mp - M)))

    # Clamp GaussianActivation params exactly like the module's forward(); alpha is NOT
    # clamped by the module, so pass it through as-is.
    params = jnp.array(
        [
            jnp.clip(a, 1.01, 6.0),
            jnp.clip(mu, 0.1, 3.0),
            jnp.clip(gamma_l, 0.5, 2.0),
            jnp.clip(gamma_r, 0.5, 2.0),
            alpha,
        ],
        dtype=jnp.float32,
    )

    cost = pl.CostEstimate(
        flops=2 * Op * Kd * Mp,
        transcendentals=3 * Op * Mp,
        bytes_accessed=2 * (Kd * Mp + Op * Kd) + 4 * 2 * Op * Mp,
    )

    out_t, gauss_t = pl.pallas_call(
        _reverse_attention_kernel,
        out_shape=(
            jax.ShapeDtypeStruct((Op, Mp), jnp.float32),
            jax.ShapeDtypeStruct((Op, Mp), jnp.float32),
        ),
        grid_spec=pl.GridSpec(
            grid=(grid_m,),
            in_specs=[
                pl.BlockSpec((Op, Kd), lambda i: (0, 0)),    # weight (constant across grid)
                pl.BlockSpec((Kd, TM), lambda i: (0, i)),    # patches^T tile (big stream)
                pl.BlockSpec(memory_space=pltpu.MemorySpace.SMEM),
            ],
            out_specs=[
                pl.BlockSpec((Op, TM), lambda i: (0, i)),
                pl.BlockSpec((Op, TM), lambda i: (0, i)),
            ],
        ),
        compiler_params=pltpu.CompilerParams(
            dimension_semantics=("parallel",),
        ),
        cost_estimate=cost,
    )(w_mat, pT, params)

    def to_nchw(t):
        # Drop padded O rows / M columns (padded entries have conv==0 -> nonzero gaussian,
        # so they MUST be dropped here), then (O, N*Ho*Wo) -> (N, O, Ho, Wo).
        valid = t[:O, :M]
        return jnp.transpose(valid.reshape(O, N, Ho, Wo), (1, 0, 2, 3))

    return to_nchw(out_t), to_nchw(gauss_t)


def _reference(x, w, a, mu, gamma_l, gamma_r, alpha):
    conv = jax.lax.conv_general_dilated(
        x, w, window_strides=(2, 2), padding=((1, 1), (1, 1)),
        dimension_numbers=("NCHW", "OIHW", "NCHW"))
    a = jnp.clip(a, 1.01, 6.0)
    mu = jnp.clip(mu, 0.1, 3.0)
    gamma_l = jnp.clip(gamma_l, 0.5, 2.0)
    gamma_r = jnp.clip(gamma_r, 0.5, 2.0)
    left = conv < mu
    gauss = jnp.where(left,
                      a * jnp.exp(-gamma_l * (conv - mu) ** 2),
                      1.0 + (a - 1.0) * jnp.exp(-gamma_r * (conv - mu) ** 2))
    out = jnp.power(jnp.maximum(conv, 0.0), alpha)
    return out, gauss


if __name__ == "__main__":
    key = jax.random.PRNGKey(0)
    k_x, k_w = jax.random.split(key)

    N, C, H, W = 2, 4, 16, 16
    O, K = 8, 4

    # Deterministic inputs / params (weights_init 'gaussian': N(0, 0.02), no bias).
    x = jax.random.uniform(k_x, (N, C, H, W), dtype=jnp.float32) * 4.0
    weight = 0.02 * jax.random.normal(k_w, (O, C, K, K), dtype=jnp.float32)

    output_masks, gaussian_masks = reverse_attention_layer(x, weight)
    jax.block_until_ready((output_masks, gaussian_masks))

    assert output_masks.shape == (N, O, H // 2, W // 2)
    assert gaussian_masks.shape == (N, O, H // 2, W // 2)

    # Numerical check against a pure-JAX f32 reference of the module's forward.
    # Tolerance is 1e-2 because the MXU operands are bf16 (accumulation stays f32).
    ref_out, ref_gauss = _reference(x, weight, 1.1, 2.0, 1.0, 1.0, 0.8)
    assert jnp.allclose(output_masks, ref_out, rtol=1e-2, atol=1e-2)
    assert jnp.allclose(gaussian_masks, ref_gauss, rtol=1e-2, atol=1e-2)

    print("KERNEL_OK")
</pallas_src>

<mosaic_0001>
module attributes {stable_mosaic.version = 11 : i64} {
  func.func @_reverse_attention_kernel(%arg0: i32, %arg1: memref<8x64xbf16, #tpu.memory_space<vmem>>, %arg2: memref<64x128xbf16, #tpu.memory_space<vmem>>, %arg3: memref<5xf32, #tpu.memory_space<smem>>, %arg4: memref<8x128xf32, #tpu.memory_space<vmem>>, %arg5: memref<8x128xf32, #tpu.memory_space<vmem>>) attributes {dimension_semantics = [#tpu.dimension_semantics<parallel>], iteration_bounds = array<i64: 1>, scalar_prefetch = 0 : i64, scratch_operands = 0 : i64, tpu.core_type = #tpu.core_type<tc>, window_params = [{pipeline_mode = #tpu.pipeline_mode<synchronous>, transform_indices = @transform_0, window_bounds = array<i64: 8, 64>}, {transform_indices = @transform_1, window_bounds = array<i64: 64, 128>}, {transform_indices = @transform_2, window_bounds = array<i64: 5>}, {transform_indices = @transform_3, window_bounds = array<i64: 8, 128>}, {transform_indices = @transform_4, window_bounds = array<i64: 8, 128>}]} {
    %c0 = arith.constant 0 : index
    %c0_0 = arith.constant 0 : index
    %0 = vector.load %arg1[%c0, %c0_0] : memref<8x64xbf16, #tpu.memory_space<vmem>>, vector<8x64xbf16>
    %c0_1 = arith.constant 0 : index
    %c0_2 = arith.constant 0 : index
    %1 = vector.load %arg2[%c0_1, %c0_2] : memref<64x128xbf16, #tpu.memory_space<vmem>>, vector<64x128xbf16>
    %cst = arith.constant dense<0.000000e+00> : vector<8x128xf32>
    %2 = tpu.matmul %0, %1, %cst {dimension_numbers = #tpu.dot_dimension_numbers<[1], [0], [0], [1], [0, 0, 1, 1], [], []>} : vector<8x64xbf16>, vector<64x128xbf16>, vector<8x128xf32> -> vector<8x128xf32>
    %c0_3 = arith.constant 0 : index
    %3 = memref.load %arg3[%c0_3] : memref<5xf32, #tpu.memory_space<smem>>
    %c1 = arith.constant 1 : index
    %4 = memref.load %arg3[%c1] : memref<5xf32, #tpu.memory_space<smem>>
    %c2 = arith.constant 2 : index
    %5 = memref.load %arg3[%c2] : memref<5xf32, #tpu.memory_space<smem>>
    %c3 = arith.constant 3 : index
    %6 = memref.load %arg3[%c3] : memref<5xf32, #tpu.memory_space<smem>>
    %c4 = arith.constant 4 : index
    %7 = memref.load %arg3[%c4] : memref<5xf32, #tpu.memory_space<smem>>
    %8 = vector.broadcast %4 : f32 to vector<8x128xf32>
    %9 = arith.cmpf olt, %2, %8 : vector<8x128xf32>
    %10 = vector.broadcast %5 : f32 to vector<8x128xf32>
    %11 = vector.broadcast %6 : f32 to vector<8x128xf32>
    %12 = arith.select %9, %10, %11 : vector<8x128xi1>, vector<8x128xf32>
    %cst_4 = arith.constant 0.000000e+00 : f32
    %13 = vector.broadcast %cst_4 : f32 to vector<8x128xf32>
    %14 = arith.subf %13, %12 : vector<8x128xf32>
    %15 = vector.broadcast %4 : f32 to vector<8x128xf32>
    %16 = arith.subf %2, %15 : vector<8x128xf32>
    %17 = arith.mulf %16, %16 : vector<8x128xf32>
    %18 = arith.mulf %14, %17 : vector<8x128xf32>
    %19 = math.exp %18 : vector<8x128xf32>
    %cst_5 = arith.constant 1.000000e+00 : f32
    %20 = arith.subf %3, %cst_5 : f32
    %21 = vector.broadcast %3 : f32 to vector<8x128xf32>
    %22 = vector.broadcast %20 : f32 to vector<8x128xf32>
    %23 = arith.select %9, %21, %22 : vector<8x128xi1>, vector<8x128xf32>
    %cst_6 = arith.constant 0.000000e+00 : f32
    %cst_7 = arith.constant 1.000000e+00 : f32
    %24 = vector.broadcast %cst_6 : f32 to vector<8x128xf32>
    %25 = vector.broadcast %cst_7 : f32 to vector<8x128xf32>
    %26 = arith.select %9, %24, %25 : vector<8x128xi1>, vector<8x128xf32>
    %27 = arith.mulf %23, %19 : vector<8x128xf32>
    %28 = arith.addf %26, %27 : vector<8x128xf32>
    %c0_8 = arith.constant 0 : index
    %c0_9 = arith.constant 0 : index
    %29 = vector.load %arg5[%c0_8, %c0_9] : memref<8x128xf32, #tpu.memory_space<vmem>>, vector<8x128xf32>
    tpu.vector_store %arg5[%c0_8, %c0_9], %28 {strides = array<i32>} : memref<8x128xf32, #tpu.memory_space<vmem>>, vector<8x128xf32>,
    %cst_10 = arith.constant 0.000000e+00 : f32
    %30 = vector.broadcast %cst_10 : f32 to vector<8x128xf32>
    %31 = arith.maximumf %2, %30 : vector<8x128xf32>
    %cst_11 = arith.constant 0.000000e+00 : f32
    %32 = vector.broadcast %cst_11 : f32 to vector<8x128xf32>
    %33 = arith.cmpf ogt, %31, %32 : vector<8x128xf32>
    %cst_12 = arith.constant 1.000000e+00 : f32
    %34 = vector.broadcast %cst_12 : f32 to vector<8x128xf32>
    %35 = arith.select %33, %31, %34 : vector<8x128xi1>, vector<8x128xf32>
    %36 = math.log %35 : vector<8x128xf32>
    %37 = vector.broadcast %7 : f32 to vector<8x128xf32>
    %38 = arith.mulf %37, %36 : vector<8x128xf32>
    %39 = math.exp %38 : vector<8x128xf32>
    %cst_13 = arith.constant 0.000000e+00 : f32
    %40 = vector.broadcast %cst_13 : f32 to vector<8x128xf32>
    %41 = arith.select %33, %39, %40 : vector<8x128xi1>, vector<8x128xf32>
    %c0_14 = arith.constant 0 : index
    %c0_15 = arith.constant 0 : index
    %42 = vector.load %arg4[%c0_14, %c0_15] : memref<8x128xf32, #tpu.memory_space<vmem>>, vector<8x128xf32>
    tpu.vector_store %arg4[%c0_14, %c0_15], %41 {strides = array<i32>} : memref<8x128xf32, #tpu.memory_space<vmem>>, vector<8x128xf32>,
    return
  }
  func.func @transform_0(%arg0: i32) -> (i32, i32) {
    %c0_i32 = arith.constant 0 : i32
    %c0_i32_0 = arith.constant 0 : i32
    %c0_i32_1 = arith.constant 0 : i32
    return %c0_i32, %c0_i32_0 : i32, i32
  }
  func.func @transform_1(%arg0: i32) -> (i32, i32) {
    %c0_i32 = arith.constant 0 : i32
    %c0_i32_0 = arith.constant 0 : i32
    return %c0_i32, %arg0 : i32, i32
  }
  func.func @transform_2(%arg0: i32) -> i32 {
    %c0_i32 = arith.constant 0 : i32
    %c0_i32_0 = arith.constant 0 : i32
    return %c0_i32 : i32
  }
  func.func @transform_3(%arg0: i32) -> (i32, i32) {
    %c0_i32 = arith.constant 0 : i32
    %c0_i32_0 = arith.constant 0 : i32
    return %c0_i32, %arg0 : i32, i32
  }
  func.func @transform_4(%arg0: i32) -> (i32, i32) {
    %c0_i32 = arith.constant 0 : i32
    %c0_i32_0 = arith.constant 0 : i32
    return %c0_i32, %arg0 : i32, i32
  }
}

</mosaic_0001>

<llo_original>
// kernel: tpu_custom_call.1
$region0: #{tpu_custom_call.1}
  #allocation0 [shape = 'u32[]', space=smem, size = 0x4, offset = 0x4, fixed_abs, tag = 'smem constant byte address 0x4 - core index']
  #allocation1 [shape = 'u32[144,128]{1,0:T(1,128)}', space=vmem, size = 0x12000, scoped, tag = 'internal scratch']
  %s0 = inlined_call_operand.hbm [shape: bf16[8,64], index: 0, kind: input, shape index: {}]
  %s1 = inlined_call_operand.hbm [shape: bf16[64,128], index: 1, kind: input, shape index: {}]
  %s2 = inlined_call_operand.vmem [shape: f32[5], index: 2, kind: input, shape index: {}]
  %s3 = inlined_call_operand.hbm [shape: f32[8,128], index: 3, kind: output, shape index: {0}]
  %s4 = inlined_call_operand.hbm [shape: f32[8,128], index: 4, kind: output, shape index: {1}]
  %5 = xla_tuple %s3, %s4
  %s6 = sld [smem:[#allocation0]]
  $region42: #{tpu_custom_call.1} parent=0
    _
  %s8 = ssub.s32 1, %s6
  %s9 = scalar_select 0, %s8, %s6
  $region1: #{tpu_custom_call.1} parent=0
    #allocation2 [shape = 'u8[2048]{0}', space=vmem, size = 0x800, scoped, tag = 'input window, operand 0, single buffered']
    #allocation3 [shape = 's32[1]{0}', space=sflag, size = 0x4, scoped, tag = 'scoped memory for tpu_custom_call.1']
    #allocation4 [shape = 's32[1]{0}', space=sflag, size = 0x4, scoped, tag = 'scoped memory for tpu_custom_call.1']
    #allocation5 [shape = 's32[1]{0}', space=sflag, size = 0x4, scoped, tag = 'scoped memory for tpu_custom_call.1']
    #allocation6 [shape = 'u8[16384]{0}', space=vmem, size = 0x4000, scoped, tag = 'input window, operand 1, single buffered']
    #allocation7 [shape = 's32[1]{0}', space=sflag, size = 0x4, scoped, tag = 'scoped memory for tpu_custom_call.1']
    #allocation8 [shape = 'u8[512]{0}', space=smem, size = 0x200, scoped, tag = 'input window, operand 2, single buffered']
    #allocation9 [shape = 'u8[4096]{0}', space=vmem, size = 0x1000, scoped, tag = 'output window, operand 0, single buffered']
    #allocation10 [shape = 'u8[4096]{0}', space=vmem, size = 0x1000, scoped, tag = 'output window, operand 1, single buffered']
    #allocation11 [shape = 's32[1]{0}', space=sflag, size = 0x4, scoped, tag = 'scoped memory for tpu_custom_call.1']
    %10 = vsyncpa [#allocation3], 0
    %11 = vsyncpa [#allocation7], 0
    %12 = vsyncpa [#allocation5], 0
    %13 = vsyncpa [#allocation4], 0
    %14 = vsyncpa [#allocation11], 0
    // Predicated region
    $region2: #{tpu_custom_call.1} parent=1 // pred_check
      _
    $region3: #{tpu_custom_call.1} parent=1 // pred_check_branch
      %16 = sbr.rel (0) target = $region5
    $region4: #{tpu_custom_call.1} parent=1 // pred_region
      %s18 = ssub.s32 64, 64
      %19 = vsyncadd [#allocation3], %s18
      %s21 = sshll.u32 [#allocation2], 4
      %s22 = int_to_ptr.vmem [resolvable:$true] %s21
      %24 = dma.hbm_to_vmem [thread:$0]  %s0, 64, %s22, [#allocation3]
    $region5: #{tpu_custom_call.1} parent=1 // pred_fallthru
      _
    // Predicated region
    $region6: #{tpu_custom_call.1} parent=1 // pred_check
      _
    $region7: #{tpu_custom_call.1} parent=1 // pred_check_branch
      %26 = sbr.rel (0) target = $region9
    $region8: #{tpu_custom_call.1} parent=1 // pred_region
      %s28 = ssub.s32 512, 512
      %29 = vsyncadd [#allocation7], %s28
      %s30 = sshll.u32 [#allocation6], 4
      %s31 = int_to_ptr.vmem [resolvable:$true] %s30
      %36 = dma.hbm_to_vmem [thread:$0]  %s1, 512, %s31, [#allocation7], 64, 64, 4
    $region9: #{tpu_custom_call.1} parent=1 // pred_fallthru
      _
    // Predicated region
    $region10: #{tpu_custom_call.1} parent=1 // pred_check
      _
    $region11: #{tpu_custom_call.1} parent=1 // pred_check_branch
      %38 = sbr.rel (0) target = $region13
    $region12: #{tpu_custom_call.1} parent=1 // pred_region
      %s40 = ssub.s32 16, 16
      %41 = vsyncadd [#allocation5], %s40
      %s43 = sshll.u32 %s2, 4
      %s44 = int_to_ptr.vmem [resolvable:$true] %s43
      %46 = dma.vmem_to_smem %s44, 16, [#allocation8], [#allocation5]
    $region13: #{tpu_custom_call.1} parent=1 // pred_fallthru
      _
    // Predicated region
    $region14: #{tpu_custom_call.1} parent=1 // pred_check
      _
    $region15: #{tpu_custom_call.1} parent=1 // pred_check_branch
      %48 = sbr.rel (0) target = $region17
    $region16: #{tpu_custom_call.1} parent=1 // pred_region
      %49 = dma.done [#allocation3], 64
    $region17: #{tpu_custom_call.1} parent=1 // pred_fallthru
      _
    // Predicated region
    $region18: #{tpu_custom_call.1} parent=1 // pred_check
      _
    $region19: #{tpu_custom_call.1} parent=1 // pred_check_branch
      %51 = sbr.rel (0) target = $region21
    $region20: #{tpu_custom_call.1} parent=1 // pred_region
      %52 = dma.done [#allocation7], 512
    $region21: #{tpu_custom_call.1} parent=1 // pred_fallthru
      _
    // Predicated region
    $region22: #{tpu_custom_call.1} parent=1 // pred_check
      _
    $region23: #{tpu_custom_call.1} parent=1 // pred_check_branch
      %54 = sbr.rel (0) target = $region25
    $region24: #{tpu_custom_call.1} parent=1 // pred_region
      %55 = dma.done [#allocation5], 16
    $region25: #{tpu_custom_call.1} parent=1 // pred_fallthru
      _
    %56 = sfence
    %v58 = vld [vmem:[#allocation2] sm:$0xf]
    %v59 = vld [vmem:[#allocation6] sm:$0xf]
    %v60 = vld [vmem:[#allocation6 + $0x4] sm:$0xf]
    %v61 = vld [vmem:[#allocation6 + $0x8] sm:$0xf]
    %v62 = vld [vmem:[#allocation6 + $0xc] sm:$0xf]
    %v63 = vld [vmem:[#allocation6 + $0x10] sm:$0xf]
    %v64 = vld [vmem:[#allocation6 + $0x14] sm:$0xf]
    %v65 = vld [vmem:[#allocation6 + $0x18] sm:$0xf]
    %v66 = vld [vmem:[#allocation6 + $0x1c] sm:$0xf]
    %v75 = vunpack.c.l.b16 %v59
    %v76 = vunpack.c.l.b16 %v60
    %v77 = vunpack.c.l.b16 %v61
    %v78 = vunpack.c.l.b16 %v62
    %v79 = vunpack.c.l.b16 %v63
    %v80 = vunpack.c.l.b16 %v64
    %v81 = vunpack.c.l.b16 %v65
    %v82 = vunpack.c.l.b16 %v66
    %v83 = vpack.c.b16 %v76, %v75
    %v84 = vpack.c.b16 %v78, %v77
    %v85 = vpack.c.b16 %v80, %v79
    %v86 = vpack.c.b16 %v82, %v81
    %vm91 = vcmask 523264
    %v93 = vsel %vm91, %v58, 0
    %95 = vmatprep.subr.bf16.mxu0 0
    %96 = vmatpush1.bf16.msra.mxu0 0
    %97 = vmatprep.subr.bf16.mxu0 0
    %98 = vmatpush1.bf16.msra.mxu0 0
    %99 = vmatprep.subr.bf16.mxu0 0
    %100 = vmatpush1.bf16.msra.mxu0 0
    %101 = vmatprep.subr.bf16.mxu0 0
    %102 = vmatpush1.bf16.msra.mxu0 0
    %103 = vmatprep.subr.bf16.mxu0 0
    %104 = vmatpush1.bf16.msra.mxu0 %v86
    %105 = vmatprep.subr.bf16.mxu0 0
    %106 = vmatpush1.bf16.msra.mxu0 %v85
    %107 = vmatprep.subr.bf16.mxu0 0
    %108 = vmatpush1.bf16.msra.mxu0 %v84
    %109 = vmatprep.subr.bf16.mxu0 0
    %110 = vmatpush1.bf16.msra.mxu0 %v83
    %111 = vmatprep.subr.bf16.mxu0 0
    %112 = vmatpush2.bf16.msra.mxu0 0
    %113 = vmatprep.subr.bf16.mxu0 0
    %114 = vmatpush2.bf16.msra.mxu0 0
    %115 = vmatprep.subr.bf16.mxu0 0
    %116 = vmatpush2.bf16.msra.mxu0 0
    %117 = vmatprep.subr.bf16.mxu0 0
    %118 = vmatpush2.bf16.msra.mxu0 0
    %119 = vmatprep.subr.bf16.mxu0 0
    %120 = vmatpush2.bf16.msra.mxu0 0
    %121 = vmatprep.subr.bf16.mxu0 0
    %122 = vmatpush2.bf16.msra.mxu0 0
    %123 = vmatprep.subr.bf16.mxu0 0
    %124 = vmatpush2.bf16.msra.mxu0 0
    %125 = vmatprep.subr.bf16.mxu0 0
    %126 = vmatpush2.bf16.msra.mxu0 0
    %127 = vmatprep.mubr.bf16.mxu0 0
    %128 = vmatmul.mubr.bf16.gmra.mxu0 %v93
    %v129 = vpop.f32.mrf.mxu0
    %v130 = vadd.f32 0.0, %v129
    %v131 = vpop.f32.mrf.mxu0
    %v132 = vpop.f32.mrf.mxu0
    %v133 = vpop.f32.mrf.mxu0
    %134 = vdwg.mxu0
    %s135 = sld [smem:[#allocation8]]
    %s136 = sld [smem:[#allocation8 + $0x1]]
    %s137 = sld [smem:[#allocation8 + $0x2]]
    %s138 = sld [smem:[#allocation8 + $0x3]]
    %s139 = sld [smem:[#allocation8 + $0x4]]
    %v140 = vstv %s136
    %vm141 = vcmp.lt.f32.partialorder %v130, %v140
    %v142 = vstv %s137
    %v143 = vstv %s138
    %v144 = vsel %vm141, %v142, %v143
    %v145 = vsub.f32 0.0, %v144
    %v146 = vsub.f32 %v130, %v140
    %v147 = vmul.f32 %v146, %v146
    %v148 = vmul.f32 %v145, %v147
    %v149 = vmul.f32 %v148, 1.442695
    %v150 = vpow.pop %v149
    %s151 = ssub.f32 %s135, 1.0
    %v152 = vstv %s135
    %v153 = vstv %s151
    %v154 = vsel %vm141, %v152, %v153
    %v155 = vsel %vm141, 0.0, 1.0
    %v156 = vmul.f32 %v154, %v150
    %v157 = vadd.f32 %v155, %v156
    %158 = vst [vmem:[#allocation10] sm:$0xff] %v157
    %v159 = vmax.f32 %v130, 0.0
    %vm160 = vcmp.gt.f32.partialorder %v159, 0.0
    %v161 = vsel %vm160, %v159, 1.0
    %v162 = vlog2.pop %v161
    %v163 = vmul.f32 %v162, 0.6931472
    %v164 = vstv %s139
    %v165 = vmul.f32 %v164, %v163
    %v166 = vmul.f32 %v165, 1.442695
    %v167 = vpow.pop %v166
    %v168 = vsel %vm160, %v167, 0.0
    %169 = vst [vmem:[#allocation9] sm:$0xff] %v168
    // Predicated region
    $region26: #{tpu_custom_call.1} parent=1 // pred_check
      _
    $region27: #{tpu_custom_call.1} parent=1 // pred_check_branch
      %171 = sbr.rel (0) target = $region29
    $region28: #{tpu_custom_call.1} parent=1 // pred_region
      %s173 = ssub.s32 128, 128
      %174 = vsyncadd [#allocation4], %s173
      %s176 = sshll.u32 [#allocation9], 4
      %s177 = int_to_ptr.vmem [resolvable:$true] %s176
      %179 = dma.vmem_to_hbm [thread:$0]  %s177, 128, %s3, [#allocation4]
    $region29: #{tpu_custom_call.1} parent=1 // pred_fallthru
      _
    // Predicated region
    $region30: #{tpu_custom_call.1} parent=1 // pred_check
      _
    $region31: #{tpu_custom_call.1} parent=1 // pred_check_branch
      %181 = sbr.rel (0) target = $region33
    $region32: #{tpu_custom_call.1} parent=1 // pred_region
      %s183 = ssub.s32 128, 128
      %184 = vsyncadd [#allocation11], %s183
      %s186 = sshll.u32 [#allocation10], 4
      %s187 = int_to_ptr.vmem [resolvable:$true] %s186
      %189 = dma.vmem_to_hbm [thread:$0]  %s187, 128, %s4, [#allocation11]
    $region33: #{tpu_custom_call.1} parent=1 // pred_fallthru
      _
    // Predicated region
    $region34: #{tpu_custom_call.1} parent=1 // pred_check
      _
    $region35: #{tpu_custom_call.1} parent=1 // pred_check_branch
      %191 = sbr.rel (0) target = $region37
    $region36: #{tpu_custom_call.1} parent=1 // pred_region
      %192 = dma.done [#allocation4], 128
    $region37: #{tpu_custom_call.1} parent=1 // pred_fallthru
      _
    // Predicated region
    $region38: #{tpu_custom_call.1} parent=1 // pred_check
      _
    $region39: #{tpu_custom_call.1} parent=1 // pred_check_branch
      %194 = sbr.rel (0) target = $region41
    $region40: #{tpu_custom_call.1} parent=1 // pred_region
      %195 = dma.done [#allocation11], 128
    $region41: #{tpu_custom_call.1} parent=1 // pred_fallthru
      _
    %196 = vsyncpa [#allocation3], 1
    %197 = vsyncpa [#allocation7], 1
    %198 = vsyncpa [#allocation4], 1
    %199 = vsyncpa [#allocation11], 1
    %200 = vsyncpa [#allocation5], 1

</llo_original>
